<compile_context>
chip_gen: v5e
topology: v5e:2x2
jax: 0.10.0
libtpu: 0.0.40
codegen_flags: <defaults>
</compile_context>

<pallas_src>
import jax
import jax.numpy as jnp
from jax.experimental import pallas as pl
from jax.experimental.pallas import tpu as pltpu


def _round_up(v, m):
    return ((v + m - 1) // m) * m


def _mlp_kernel(x_ref, w1_ref, b1_ref, w2_ref, b2_ref, out_ref):
    # x tile is f32 in VMEM; cast to bf16 in-kernel (saves a wrapper cast pass).
    xb = x_ref[...].astype(jnp.bfloat16)
    # hidden = relu(x @ W1 + b1); W1 pre-transposed at init to (in_dim, hid).
    h = jnp.dot(xb, w1_ref[...], preferred_element_type=jnp.float32)
    h = jnp.maximum(h + b1_ref[...], 0.0)          # f32 epilogue on the VPU
    # out = hidden @ W2 + b2; W2 pre-transposed at init to (hid, out_pad) so
    # the output lane dim is dense.  bf16 recast of h is intentional.
    o = jnp.dot(h.astype(w2_ref.dtype), w2_ref[...],
                preferred_element_type=jnp.float32)
    out_ref[...] = (o + b2_ref[...]).astype(out_ref.dtype)


def prepare_params(w_shared, b_shared, head_weights, head_biases):
    """One-time (init) conversion.

    * bf16 cast of weights, f32 biases.
    * Transpose from PyTorch (out_features, in_features) to matmul-friendly
      (in_features, out_features) layout -> no runtime transposes anywhere.
    * Zero-pad each head's output width to a lane-dense multiple of 128.
    """
    w1 = jnp.asarray(w_shared, jnp.float32).astype(jnp.bfloat16).T   # (in, hid)
    b1 = jnp.asarray(b_shared, jnp.float32).reshape(1, -1)           # (1, hid)
    heads = []
    for w2, b2 in zip(head_weights, head_biases):
        out_dim, hid = w2.shape
        out_pad = _round_up(max(out_dim, 128), 128)
        w2t = jnp.zeros((hid, out_pad), jnp.bfloat16).at[:, :out_dim].set(
            jnp.asarray(w2, jnp.float32).astype(jnp.bfloat16).T)     # (hid, out_pad)
        b2p = jnp.zeros((1, out_pad), jnp.float32).at[0, :out_dim].set(
            jnp.asarray(b2, jnp.float32))
        heads.append((w2t, b2p, out_dim))
    return w1, b1, heads


def _pick_batch_tile(B, in_dim, hid, out_pad):
    """Choose a batch tile TB (multiple of 16) limiting pad waste and VMEM."""
    B16 = _round_up(B, 16)
    # Cap TB so the live f32 x/hidden/out slabs stay around ~4 MiB.
    row_bytes = (in_dim + hid + out_pad) * 4
    tb_cap = max(16, (4 * 1024 * 1024) // max(row_bytes, 1))
    candidates = [c for c in (1024, 512, 256, 128, 64, 32, 16) if c <= tb_cap]
    if not candidates:
        candidates = [16]
    best = None
    for c in candidates:                       # descending: prefer largest TB
        b_pad = _round_up(B16, c)
        waste = b_pad - B16
        if waste * 8 <= b_pad:                 # <= 12.5% padded work
            return c, b_pad
        if best is None or b_pad < best[1]:
            best = (c, b_pad)
    return best


def _vmem_limit_bytes(TB, in_dim, hid, out_pad):
    # Double-buffered f32 x/out tiles, resident weights counted 2x (in case the
    # pipeliner double-buffers constant-index blocks), live f32 hidden slab.
    weight_bytes = (in_dim * hid + hid * out_pad) * 2 + (hid + out_pad) * 4
    tile_bytes = 2 * TB * in_dim * 4 + 2 * TB * out_pad * 4 + TB * hid * 4
    vmem_needed = 2 * weight_bytes + tile_bytes
    try:
        # ~0.75x physical VMEM: ~96 MiB on v5e/v6e, ~48 MiB per TC on v7x.
        vmem_cap = int(pltpu.get_tpu_info().vmem_capacity_bytes) * 3 // 4
    except Exception:
        vmem_cap = 48 * 1024 * 1024
    return int(min(vmem_cap, max(2 * vmem_needed, 16 * 1024 * 1024)))


def multi_task_nn_forward(params, x, task_id):
    """Forward pass of MultiTaskNN: relu(shared(x)) -> output_heads[task_id-1]."""
    w1, b1, heads = params
    num_heads = len(heads)
    if not (0 < task_id <= num_heads):
        # Same Python-level control flow as the PyTorch module (message fixed
        # to reflect the actual accepted range 1..num_heads).
        raise ValueError(
            f'Invalid task_id: should be between 1 and {num_heads}')
    w2, b2, out_dim = heads[task_id - 1]

    B, in_dim = x.shape
    hid = w1.shape[1]
    out_pad = w2.shape[1]

    TB, B_pad = _pick_batch_tile(B, in_dim, hid, out_pad)
    x_f32 = x.astype(jnp.float32)
    if B_pad != B:
        # Pad rows are garbage-in/garbage-out; they are sliced off below.
        x_f32 = jnp.pad(x_f32, ((0, B_pad - B), (0, 0)))

    out = pl.pallas_call(
        _mlp_kernel,
        out_shape=jax.ShapeDtypeStruct((B_pad, out_pad), jnp.float32),
        grid_spec=pltpu.PrefetchScalarGridSpec(
            num_scalar_prefetch=0,
            grid=(B_pad // TB,),
            in_specs=[
                pl.BlockSpec((TB, in_dim), lambda i: (i, 0)),    # x: batch-tiled
                pl.BlockSpec((in_dim, hid), lambda i: (0, 0)),   # W1^T: resident
                pl.BlockSpec((1, hid), lambda i: (0, 0)),        # b1: resident
                pl.BlockSpec((hid, out_pad), lambda i: (0, 0)),  # W2^T: resident
                pl.BlockSpec((1, out_pad), lambda i: (0, 0)),    # b2: resident
            ],
            out_specs=pl.BlockSpec((TB, out_pad), lambda i: (i, 0)),
        ),
        compiler_params=pltpu.CompilerParams(
            # Batch axis is independent -> megacore-shardable on v7x.
            dimension_semantics=("parallel",),
            vmem_limit_bytes=_vmem_limit_bytes(TB, in_dim, hid, out_pad)),
    )(x_f32, w1, b1, w2, b2)

    return out[:B, :out_dim]


if __name__ == "__main__":
    # Small shapes consistent with the module: batch=8, input_dim=16,
    # hidden_dim=32, three task heads with output_dim=4 each.
    B, IN, HID = 8, 16, 32
    HEAD_OUT = (4, 4, 4)
    NUM_TASKS = len(HEAD_OUT)

    key = jax.random.PRNGKey(0)
    keys = jax.random.split(key, 3 + 2 * NUM_TASKS)
    kx, kw1, kb1 = keys[0], keys[1], keys[2]

    x = jax.random.normal(kx, (B, IN), dtype=jnp.float32)
    w_shared = jax.random.normal(kw1, (HID, IN), dtype=jnp.float32) * 0.1
    b_shared = jax.random.normal(kb1, (HID,), dtype=jnp.float32) * 0.1

    head_ws, head_bs = [], []
    for t, od in enumerate(HEAD_OUT):
        kw, kb = keys[3 + 2 * t], keys[4 + 2 * t]
        head_ws.append(jax.random.normal(kw, (od, HID), dtype=jnp.float32) * 0.1)
        head_bs.append(jax.random.normal(kb, (od,), dtype=jnp.float32) * 0.1)

    params = prepare_params(w_shared, b_shared, head_ws, head_bs)

    ok = True
    for task_id in range(1, NUM_TASKS + 1):
        out = multi_task_nn_forward(params, x, task_id)
        out = jax.block_until_ready(out)
        # f32 reference with the PyTorch forward semantics.
        h_ref = jnp.maximum(x @ w_shared.T + b_shared, 0.0)
        ref = h_ref @ head_ws[task_id - 1].T + head_bs[task_id - 1]
        assert out.shape == (B, HEAD_OUT[task_id - 1])
        # bf16 MXU inputs with f32 accumulation -> loosened tolerance.
        assert jnp.allclose(out, ref, atol=2e-2, rtol=2e-2), task_id

    # Invalid task_id must raise, mirroring the PyTorch module.
    try:
        multi_task_nn_forward(params, x, 0)
        ok = False
    except ValueError:
        pass

    if ok:
        print("KERNEL_OK")
</pallas_src>

<mosaic_0001>
module attributes {stable_mosaic.version = 11 : i64} {
  func.func @_mlp_kernel(%arg0: i32, %arg1: memref<16x16xf32, #tpu.memory_space<vmem>>, %arg2: memref<16x32xbf16, #tpu.memory_space<vmem>>, %arg3: memref<1x32xf32, #tpu.memory_space<vmem>>, %arg4: memref<32x128xbf16, #tpu.memory_space<vmem>>, %arg5: memref<1x128xf32, #tpu.memory_space<vmem>>, %arg6: memref<16x128xf32, #tpu.memory_space<vmem>>) attributes {dimension_semantics = [#tpu.dimension_semantics<parallel>], iteration_bounds = array<i64: 1>, scalar_prefetch = 0 : i64, scratch_operands = 0 : i64, tpu.core_type = #tpu.core_type<tc>, window_params = [{transform_indices = @transform_0, window_bounds = array<i64: 16, 16>}, {pipeline_mode = #tpu.pipeline_mode<synchronous>, transform_indices = @transform_1, window_bounds = array<i64: 16, 32>}, {pipeline_mode = #tpu.pipeline_mode<synchronous>, transform_indices = @transform_2, window_bounds = array<i64: 1, 32>}, {pipeline_mode = #tpu.pipeline_mode<synchronous>, transform_indices = @transform_3, window_bounds = array<i64: 32, 128>}, {pipeline_mode = #tpu.pipeline_mode<synchronous>, transform_indices = @transform_4, window_bounds = array<i64: 1, 128>}, {transform_indices = @transform_5, window_bounds = array<i64: 16, 128>}]} {
    %c0 = arith.constant 0 : index
    %c0_0 = arith.constant 0 : index
    %0 = vector.load %arg1[%c0, %c0_0] : memref<16x16xf32, #tpu.memory_space<vmem>>, vector<16x16xf32>
    %1 = arith.truncf %0 : vector<16x16xf32> to vector<16x16xbf16>
    %c0_1 = arith.constant 0 : index
    %c0_2 = arith.constant 0 : index
    %2 = vector.load %arg2[%c0_1, %c0_2] : memref<16x32xbf16, #tpu.memory_space<vmem>>, vector<16x32xbf16>
    %cst = arith.constant dense<0.000000e+00> : vector<16x32xf32>
    %3 = tpu.matmul %1, %2, %cst {dimension_numbers = #tpu.dot_dimension_numbers<[1], [0], [0], [1], [0, 0, 1, 1], [], []>} : vector<16x16xbf16>, vector<16x32xbf16>, vector<16x32xf32> -> vector<16x32xf32>
    %c0_3 = arith.constant 0 : index
    %c0_4 = arith.constant 0 : index
    %4 = vector.load %arg3[%c0_3, %c0_4] : memref<1x32xf32, #tpu.memory_space<vmem>>, vector<1x32xf32>
    %5 = vector.broadcast %4 : vector<1x32xf32> to vector<16x32xf32>
    %6 = arith.addf %3, %5 : vector<16x32xf32>
    %cst_5 = arith.constant 0.000000e+00 : f32
    %7 = vector.broadcast %cst_5 : f32 to vector<16x32xf32>
    %8 = arith.maximumf %6, %7 : vector<16x32xf32>
    %9 = arith.truncf %8 : vector<16x32xf32> to vector<16x32xbf16>
    %c0_6 = arith.constant 0 : index
    %c0_7 = arith.constant 0 : index
    %10 = vector.load %arg4[%c0_6, %c0_7] : memref<32x128xbf16, #tpu.memory_space<vmem>>, vector<32x128xbf16>
    %cst_8 = arith.constant dense<0.000000e+00> : vector<16x128xf32>
    %11 = tpu.matmul %9, %10, %cst_8 {dimension_numbers = #tpu.dot_dimension_numbers<[1], [0], [0], [1], [0, 0, 1, 1], [], []>} : vector<16x32xbf16>, vector<32x128xbf16>, vector<16x128xf32> -> vector<16x128xf32>
    %c0_9 = arith.constant 0 : index
    %c0_10 = arith.constant 0 : index
    %12 = vector.load %arg5[%c0_9, %c0_10] : memref<1x128xf32, #tpu.memory_space<vmem>>, vector<1x128xf32>
    %13 = vector.broadcast %12 : vector<1x128xf32> to vector<16x128xf32>
    %14 = arith.addf %11, %13 : vector<16x128xf32>
    %c0_11 = arith.constant 0 : index
    %c0_12 = arith.constant 0 : index
    %15 = vector.load %arg6[%c0_11, %c0_12] : memref<16x128xf32, #tpu.memory_space<vmem>>, vector<16x128xf32>
    tpu.vector_store %arg6[%c0_11, %c0_12], %14 {strides = array<i32>} : memref<16x128xf32, #tpu.memory_space<vmem>>, vector<16x128xf32>,
    return
  }
  func.func @transform_0(%arg0: i32) -> (i32, i32) {
    %c0_i32 = arith.constant 0 : i32
    %c0_i32_0 = arith.constant 0 : i32
    return %arg0, %c0_i32 : i32, i32
  }
  func.func @transform_1(%arg0: i32) -> (i32, i32) {
    %c0_i32 = arith.constant 0 : i32
    %c0_i32_0 = arith.constant 0 : i32
    %c0_i32_1 = arith.constant 0 : i32
    return %c0_i32, %c0_i32_0 : i32, i32
  }
  func.func @transform_2(%arg0: i32) -> (i32, i32) {
    %c0_i32 = arith.constant 0 : i32
    %c0_i32_0 = arith.constant 0 : i32
    %c0_i32_1 = arith.constant 0 : i32
    return %c0_i32, %c0_i32_0 : i32, i32
  }
  func.func @transform_3(%arg0: i32) -> (i32, i32) {
    %c0_i32 = arith.constant 0 : i32
    %c0_i32_0 = arith.constant 0 : i32
    %c0_i32_1 = arith.constant 0 : i32
    return %c0_i32, %c0_i32_0 : i32, i32
  }
  func.func @transform_4(%arg0: i32) -> (i32, i32) {
    %c0_i32 = arith.constant 0 : i32
    %c0_i32_0 = arith.constant 0 : i32
    %c0_i32_1 = arith.constant 0 : i32
    return %c0_i32, %c0_i32_0 : i32, i32
  }
  func.func @transform_5(%arg0: i32) -> (i32, i32) {
    %c0_i32 = arith.constant 0 : i32
    %c0_i32_0 = arith.constant 0 : i32
    return %arg0, %c0_i32 : i32, i32
  }
}

</mosaic_0001>

<llo_original>
// kernel: tpu_custom_call.1
$region0: #{tpu_custom_call.1}
  #allocation0 [shape = 'u32[]', space=smem, size = 0x4, offset = 0x4, fixed_abs, tag = 'smem constant byte address 0x4 - core index']
  #allocation1 [shape = 'u32[72,128]{1,0:T(1,128)}', space=vmem, size = 0x9000, scoped, tag = 'internal scratch']
  %s0 = inlined_call_operand.hbm [shape: f32[16,16], index: 0, kind: input, shape index: {}]
  %s1 = inlined_call_operand.hbm [shape: bf16[16,32], index: 1, kind: input, shape index: {}]
  %s2 = inlined_call_operand.vmem [shape: f32[1,32], index: 2, kind: input, shape index: {}]
  %s3 = inlined_call_operand.hbm [shape: bf16[32,128], index: 3, kind: input, shape index: {}]
  %s4 = inlined_call_operand.vmem [shape: f32[1,128], index: 4, kind: input, shape index: {}]
  %s5 = inlined_call_operand.hbm [shape: f32[16,128], index: 5, kind: output, shape index: {}]
  %s6 = sld [smem:[#allocation0]]
  $region42: #{tpu_custom_call.1} parent=0
    _
  %s8 = ssub.s32 1, %s6
  %s9 = scalar_select 0, %s8, %s6
  $region1: #{tpu_custom_call.1} parent=0
    #allocation2 [shape = 'u8[8192]{0}', space=vmem, size = 0x2000, scoped, tag = 'input window, operand 0, single buffered']
    #allocation3 [shape = 's32[1]{0}', space=sflag, size = 0x4, scoped, tag = 'scoped memory for tpu_custom_call.1']
    #allocation4 [shape = 's32[1]{0}', space=sflag, size = 0x4, scoped, tag = 'scoped memory for tpu_custom_call.1']
    #allocation5 [shape = 'u8[4096]{0}', space=vmem, size = 0x1000, scoped, tag = 'input window, operand 1, single buffered']
    #allocation6 [shape = 's32[1]{0}', space=sflag, size = 0x4, scoped, tag = 'scoped memory for tpu_custom_call.1']
    #allocation7 [shape = 'u8[8192]{0}', space=vmem, size = 0x2000, scoped, tag = 'input window, operand 3, single buffered']
    #allocation8 [shape = 'u8[8192]{0}', space=vmem, size = 0x2000, scoped, tag = 'output window, operand 0, single buffered']
    %10 = vsyncpa [#allocation3], 0
    %11 = vsyncpa [#allocation6], 0
    %12 = vsyncpa [#allocation4], 0
    // Predicated region
    $region2: #{tpu_custom_call.1} parent=1 // pred_check
      _
    $region3: #{tpu_custom_call.1} parent=1 // pred_check_branch
      %14 = sbr.rel (0) target = $region5
    $region4: #{tpu_custom_call.1} parent=1 // pred_region
      %16 = vsyncadd [#allocation3], 0
      %s17 = sshll.u32 %s0, 4
      %s18 = int_to_ptr.hbm [resolvable:$true] %s17
      %s19 = sshll.u32 [#allocation2], 4
      %s20 = int_to_ptr.vmem [resolvable:$true] %s19
      %25 = dma.hbm_to_vmem [thread:$0]  %s18, 256, %s20, [#allocation3], 128, 128, 8
    $region5: #{tpu_custom_call.1} parent=1 // pred_fallthru
      _
    // Predicated region
    $region6: #{tpu_custom_call.1} parent=1 // pred_check
      _
    $region7: #{tpu_custom_call.1} parent=1 // pred_check_branch
      %27 = sbr.rel (0) target = $region9
    $region8: #{tpu_custom_call.1} parent=1 // pred_region
      %29 = vsyncadd [#allocation6], 0
      %s30 = sshll.u32 %s1, 4
      %s31 = int_to_ptr.hbm [resolvable:$true] %s30
      %s32 = sshll.u32 [#allocation5], 4
      %s33 = int_to_ptr.vmem [resolvable:$true] %s32
      %38 = dma.hbm_to_vmem [thread:$0]  %s31, 128, %s33, [#allocation6], 64, 64, 4
    $region9: #{tpu_custom_call.1} parent=1 // pred_fallthru
      _
    // Predicated region
    $region10: #{tpu_custom_call.1} parent=1 // pred_check
      _
    $region11: #{tpu_custom_call.1} parent=1 // pred_check_branch
      %40 = sbr.rel (0) target = $region13
    $region12: #{tpu_custom_call.1} parent=1 // pred_region
      _
    $region13: #{tpu_custom_call.1} parent=1 // pred_fallthru
      _
    // Predicated region
    $region14: #{tpu_custom_call.1} parent=1 // pred_check
      _
    $region15: #{tpu_custom_call.1} parent=1 // pred_check_branch
      %42 = sbr.rel (0) target = $region17
    $region16: #{tpu_custom_call.1} parent=1 // pred_region
      %44 = vsyncadd [#allocation6], 0
      %s45 = sshll.u32 %s3, 4
      %s46 = int_to_ptr.hbm [resolvable:$true] %s45
      %s47 = sshll.u32 [#allocation7], 4
      %s48 = int_to_ptr.vmem [resolvable:$true] %s47
      %53 = dma.hbm_to_vmem [thread:$0]  %s46, 256, %s48, [#allocation6], 64, 64, 4
    $region17: #{tpu_custom_call.1} parent=1 // pred_fallthru
      _
    // Predicated region
    $region18: #{tpu_custom_call.1} parent=1 // pred_check
      _
    $region19: #{tpu_custom_call.1} parent=1 // pred_check_branch
      %55 = sbr.rel (0) target = $region21
    $region20: #{tpu_custom_call.1} parent=1 // pred_region
      _
    $region21: #{tpu_custom_call.1} parent=1 // pred_fallthru
      _
    // Predicated region
    $region22: #{tpu_custom_call.1} parent=1 // pred_check
      _
    $region23: #{tpu_custom_call.1} parent=1 // pred_check_branch
      %57 = sbr.rel (0) target = $region25
    $region24: #{tpu_custom_call.1} parent=1 // pred_region
      %59 = dma.done [#allocation3], 256
    $region25: #{tpu_custom_call.1} parent=1 // pred_fallthru
      _
    // Predicated region
    $region26: #{tpu_custom_call.1} parent=1 // pred_check
      _
    $region27: #{tpu_custom_call.1} parent=1 // pred_check_branch
      %61 = sbr.rel (0) target = $region29
    $region28: #{tpu_custom_call.1} parent=1 // pred_region
      %63 = dma.done [#allocation6], 128
    $region29: #{tpu_custom_call.1} parent=1 // pred_fallthru
      _
    // Predicated region
    $region30: #{tpu_custom_call.1} parent=1 // pred_check
      _
    $region31: #{tpu_custom_call.1} parent=1 // pred_check_branch
      %65 = sbr.rel (0) target = $region33
    $region32: #{tpu_custom_call.1} parent=1 // pred_region
      %67 = dma.done [#allocation6], 256
    $region33: #{tpu_custom_call.1} parent=1 // pred_fallthru
      _
    %v69 = vld [vmem:[#allocation2] sm:$0xff]
    %v70 = vld [vmem:[#allocation2 + $0x8] sm:$0xff]
    %v71 = vpack.c.bf16 %v70, %v69
    %v72 = vld [vmem:[#allocation5] sm:$0xf]
    %v73 = vld [vmem:[#allocation5 + $0x4] sm:$0xf]
    %v74 = vld [vmem:[%s2] sm:$0x1]
    %v76 = vperm.slane %v74, 0
    %v80 = vunpack.c.l.b16 %v72
    %v81 = vunpack.c.l.b16 %v73
    %v82 = vpack.c.b16 %v81, %v80
    %vm84 = vcmask 130048
    %v86 = vsel %vm84, %v71, 0
    %88 = vmatpush.bf16.msra.mxu0 0
    %89 = vmatpush.bf16.msra.mxu0 0
    %90 = vmatpush.bf16.msra.mxu0 0
    %91 = vmatpush.bf16.msra.mxu0 0
    %92 = vmatpush.bf16.msra.mxu0 0
    %93 = vmatpush.bf16.msra.mxu0 0
    %94 = vmatpush.bf16.msra.mxu0 0
    %95 = vmatpush.bf16.msra.mxu0 %v82
    %96 = vmatmul.bf16.gmra.mxu0 %v86
    %v97 = vpop.f32.mrf.mxu0
    %v98 = vadd.f32 %v76, %v97
    %v99 = vpop.f32.mrf.mxu0
    %v100 = vadd.f32 %v76, %v99
    %101 = vdwg.mxu0
    %v102 = vmax.f32 %v98, 0.0
    %v103 = vmax.f32 %v100, 0.0
    %v104 = vpack.c.bf16 %v103, %v102
    %v105 = vld [vmem:[#allocation7] sm:$0xf]
    %v106 = vld [vmem:[#allocation7 + $0x4] sm:$0xf]
    %v107 = vld [vmem:[#allocation7 + $0x8] sm:$0xf]
    %v108 = vld [vmem:[#allocation7 + $0xc] sm:$0xf]
    %v109 = vld [vmem:[%s4] sm:$0x1]
    %v111 = vperm.slane %v109, 0
    %v117 = vunpack.c.l.b16 %v105
    %v118 = vunpack.c.l.b16 %v106
    %v119 = vunpack.c.l.b16 %v107
    %v120 = vunpack.c.l.b16 %v108
    %v121 = vpack.c.b16 %v118, %v117
    %v122 = vpack.c.b16 %v120, %v119
    %vm125 = vcmask 261120
    %v127 = vsel %vm125, %v104, 0
    %129 = vmatpush.bf16.msra.mxu0 0
    %130 = vmatpush.bf16.msra.mxu0 0
    %131 = vmatpush.bf16.msra.mxu0 0
    %132 = vmatpush.bf16.msra.mxu0 0
    %133 = vmatpush.bf16.msra.mxu0 0
    %134 = vmatpush.bf16.msra.mxu0 0
    %135 = vmatpush.bf16.msra.mxu0 %v122
    %136 = vmatpush.bf16.msra.mxu0 %v121
    %137 = vmatmul.bf16.gmra.mxu0 %v127
    %v138 = vpop.f32.mrf.mxu0
    %v139 = vadd.f32 %v111, %v138
    %v140 = vpop.f32.mrf.mxu0
    %v141 = vadd.f32 %v111, %v140
    %142 = vdwg.mxu0
    %143 = vst [vmem:[#allocation8] sm:$0xff] %v139
    %144 = vst [vmem:[#allocation8 + $0x8] sm:$0xff] %v141
    // Predicated region
    $region34: #{tpu_custom_call.1} parent=1 // pred_check
      _
    $region35: #{tpu_custom_call.1} parent=1 // pred_check_branch
      %146 = sbr.rel (0) target = $region37
    $region36: #{tpu_custom_call.1} parent=1 // pred_region
      %148 = vsyncadd [#allocation4], 0
      %s149 = sshll.u32 [#allocation8], 4
      %s150 = int_to_ptr.vmem [resolvable:$true] %s149
      %s151 = sshll.u32 %s5, 4
      %s152 = int_to_ptr.hbm [resolvable:$true] %s151
      %157 = dma.vmem_to_hbm [thread:$0]  %s150, 256, %s152, [#allocation4], 128, 128, 8
    $region37: #{tpu_custom_call.1} parent=1 // pred_fallthru
      _
    // Predicated region
    $region38: #{tpu_custom_call.1} parent=1 // pred_check
      _
    $region39: #{tpu_custom_call.1} parent=1 // pred_check_branch
      %159 = sbr.rel (0) target = $region41
    $region40: #{tpu_custom_call.1} parent=1 // pred_region
      %161 = dma.done [#allocation4], 256
    $region41: #{tpu_custom_call.1} parent=1 // pred_fallthru
      _
    %162 = vsyncpa [#allocation3], 1
    %163 = vsyncpa [#allocation6], 1
    %164 = vsyncpa [#allocation4], 1

</llo_original>
